<compile_context>
chip_gen: v6e
topology: v6e:2x2x1
jax: 0.10.0
libtpu: 0.0.40
codegen_flags: <defaults>
</compile_context>

<pallas_src>
import functools

import jax
import jax.numpy as jnp
from jax import lax
from jax.experimental import pallas as pl
from jax.experimental.pallas import tpu as pltpu


def _decoder_mlp_kernel(z_ref, w1_ref, b1_ref, w2_ref, b2_ref, w3_ref, b3_ref,
                        o_ref, *, chunk, compute_dtype):
    """Fused 3-layer MLP over one batch tile, processed in register-friendly chunks."""
    cdt = compute_dtype

    # Weights use constant index_maps -> DMA'd once, VMEM-resident across all grid
    # steps.  Cast to the compute dtype once per step (tiny VPU work), hoisted out of
    # the chunk loop.  Biases stay f32 (added to the f32 accumulator).
    w1 = w1_ref[...].astype(cdt)
    w2 = w2_ref[...].astype(cdt)
    w3 = w3_ref[...].astype(cdt)
    b1 = b1_ref[...]
    b2 = b2_ref[...]
    b3 = b3_ref[...]

    n_chunks = z_ref.shape[0] // chunk  # static

    def body(c, carry):
        r0 = pl.multiple_of(c * chunk, chunk)
        # Cast the f32 input rows to the compute dtype in-register (no wrapper-side
        # HBM cast pass).
        z = z_ref[pl.ds(r0, chunk), :].astype(cdt)

        # Layer 1: (chunk, latent) @ (latent, h1) + b1, ReLU
        h = jnp.dot(z, w1, preferred_element_type=jnp.float32)
        h = jnp.maximum(h + b1, 0.0).astype(cdt)

        # Layer 2: (chunk, h1) @ (h1, h2) + b2, ReLU
        h = jnp.dot(h, w2, preferred_element_type=jnp.float32)
        h = jnp.maximum(h + b2, 0.0).astype(cdt)

        # Layer 3: (chunk, h2) @ (h2, out) + b3
        out = jnp.dot(h, w3, preferred_element_type=jnp.float32) + b3
        o_ref[pl.ds(r0, chunk), :] = out.astype(o_ref.dtype)
        return carry

    # Short static trip count -> fully unroll for LLO scheduler visibility.
    lax.fori_loop(0, n_chunks, body, 0, unroll=True)


def _round_up(x, m):
    return ((x + m - 1) // m) * m


def _pick_chunk(tb, max_chunk=256):
    """Largest power-of-two divisor of tb that is <= max_chunk (falls back to tb)."""
    c = max_chunk
    while c > 8 and tb % c != 0:
        c //= 2
    return c if tb % c == 0 else tb


@functools.partial(jax.jit, static_argnames=("block_batch", "compute_dtype"))
def decoder_forward(z, params, *, block_batch=2048, compute_dtype=jnp.bfloat16):
    """Run the decoder MLP.  z: (B, latent_dim) f32 -> (B, output_dim) f32."""
    w1, b1, w2, b2, w3, b3 = params
    B, latent_dim = z.shape
    h1 = w1.shape[1]
    h2 = w2.shape[1]
    out_dim = w3.shape[1]

    # ---- pick the batch tile ----
    if B <= 8:
        # Single block equal to the full batch (block dim == array dim satisfies the
        # (8,128) rule even when B < 8).
        tb = B
    else:
        tb = min(_round_up(block_batch, 16), _round_up(B, 16))
        # v7x: guarantee >= 2 grid steps for big batches so ("parallel",) can shard
        # across both TensorCores (v5e/v6e have one TC; harmless there).
        if B >= 512:
            tb = min(tb, _round_up(-(-B // 2), 16))
        # Never let the block exceed the batch; keeps partial-block masking confined
        # to the tail block.  Stay sublane-aligned (multiple of 8).
        if tb > B:
            tb = max((B // 8) * 8, 8)
    chunk = _pick_chunk(tb)
    grid = (pl.cdiv(B, tb),)

    in_specs = [
        pl.BlockSpec((tb, latent_dim), lambda i: (i, 0)),   # z tile (f32, cast in kernel)
        pl.BlockSpec((latent_dim, h1), lambda i: (0, 0)),   # w1 (constant -> VMEM-resident)
        pl.BlockSpec((1, h1), lambda i: (0, 0)),            # b1
        pl.BlockSpec((h1, h2), lambda i: (0, 0)),           # w2
        pl.BlockSpec((1, h2), lambda i: (0, 0)),            # b2
        pl.BlockSpec((h2, out_dim), lambda i: (0, 0)),      # w3
        pl.BlockSpec((1, out_dim), lambda i: (0, 0)),       # b3
    ]
    out_spec = pl.BlockSpec((tb, out_dim), lambda i: (i, 0))

    kernel = functools.partial(
        _decoder_mlp_kernel, chunk=chunk, compute_dtype=compute_dtype)

    # TODO(synk): for out_dim < 128 the f32 output store is lane-sparse (masked
    # vst.msk); a byte-identical (B*out_dim/128, 128) packed out_spec would make it
    # lane-dense but requires an in-kernel sublane->lane refold that Mosaic may reject,
    # so it is left out of this robustness-first version.
    return pl.pallas_call(
        kernel,
        out_shape=jax.ShapeDtypeStruct((B, out_dim), jnp.float32),
        grid_spec=pltpu.PrefetchScalarGridSpec(
            num_scalar_prefetch=0,
            grid=grid,
            in_specs=in_specs,
            out_specs=out_spec,
        ),
        compiler_params=pltpu.CompilerParams(
            dimension_semantics=("parallel",),
            # Footprint is ~1-3 MiB per step even at tb=2048; pin the scoped limit so
            # raising block_batch never trips a surprise OOM.
            vmem_limit_bytes=32 * 1024 * 1024,
        ),
    )(z, w1, b1, w2, b2, w3, b3)


def init_decoder_params(key, latent_dim, output_dim, hidden_dims=(64, 128)):
    """Deterministic init mimicking nn.Linear (U(-1/sqrt(fan_in), 1/sqrt(fan_in))).

    Weights are stored already transposed: (in_features, out_features).
    """
    dims = [latent_dim, *hidden_dims, output_dim]
    params = []
    for in_d, out_d in zip(dims[:-1], dims[1:]):
        key, kw, kb = jax.random.split(key, 3)
        bound = 1.0 / (in_d ** 0.5)
        w = jax.random.uniform(kw, (in_d, out_d), jnp.float32, -bound, bound)
        b = jax.random.uniform(kb, (1, out_d), jnp.float32, -bound, bound)
        params += [w, b]
    return tuple(params)


def decoder_reference(z, params):
    """Pure-JAX f32 reference for correctness checks."""
    w1, b1, w2, b2, w3, b3 = params
    h = jnp.maximum(z @ w1 + b1, 0.0)
    h = jnp.maximum(h @ w2 + b2, 0.0)
    return h @ w3 + b3


if __name__ == "__main__":
    latent_dim = 16
    output_dim = 32

    key = jax.random.PRNGKey(0)
    key, kz1, kz2, kz3 = jax.random.split(key, 4)
    params = init_decoder_params(key, latent_dim, output_dim)

    # --- Case 1: small batch, f32 compute path (tight agreement with reference) ---
    batch = 8
    z = jax.random.normal(kz1, (batch, latent_dim), jnp.float32)
    out_f32 = jax.block_until_ready(decoder_forward(z, params, compute_dtype=jnp.float32))
    ref = decoder_reference(z, params)
    assert out_f32.shape == (batch, output_dim), out_f32.shape
    assert jnp.allclose(out_f32, ref, atol=1e-5, rtol=1e-5), "f32 path mismatch vs reference"

    # --- Case 2: ragged batch, multi-step grid with a masked partial tail block, bf16 ---
    batch2 = 37
    z2 = jax.random.normal(kz2, (batch2, latent_dim), jnp.float32)
    out_bf16 = jax.block_until_ready(decoder_forward(z2, params, block_batch=16))
    ref2 = decoder_reference(z2, params)
    assert out_bf16.shape == (batch2, output_dim), out_bf16.shape
    assert jnp.allclose(out_bf16, ref2, atol=5e-2, rtol=5e-2), "bf16 path mismatch vs reference"

    # --- Case 3: larger batch, default settings (tile capped -> 2 grid steps, chunked) ---
    batch3 = 1000
    z3 = jax.random.normal(kz3, (batch3, latent_dim), jnp.float32)
    out3 = jax.block_until_ready(decoder_forward(z3, params))
    ref3 = decoder_reference(z3, params)
    assert out3.shape == (batch3, output_dim), out3.shape
    assert jnp.allclose(out3, ref3, atol=5e-2, rtol=5e-2), "default path mismatch vs reference"

    print("KERNEL_OK")
</pallas_src>

<mosaic_0001>
module attributes {stable_mosaic.version = 11 : i64} {
  func.func @_decoder_mlp_kernel(%arg0: i32, %arg1: memref<8x16xf32, #tpu.memory_space<vmem>>, %arg2: memref<16x64xf32, #tpu.memory_space<vmem>>, %arg3: memref<1x64xf32, #tpu.memory_space<vmem>>, %arg4: memref<64x128xf32, #tpu.memory_space<vmem>>, %arg5: memref<1x128xf32, #tpu.memory_space<vmem>>, %arg6: memref<128x32xf32, #tpu.memory_space<vmem>>, %arg7: memref<1x32xf32, #tpu.memory_space<vmem>>, %arg8: memref<8x32xf32, #tpu.memory_space<vmem>>) attributes {dimension_semantics = [#tpu.dimension_semantics<parallel>], iteration_bounds = array<i64: 1>, scalar_prefetch = 0 : i64, scratch_operands = 0 : i64, tpu.core_type = #tpu.core_type<tc>, window_params = [{transform_indices = @transform_0, window_bounds = array<i64: 8, 16>}, {pipeline_mode = #tpu.pipeline_mode<synchronous>, transform_indices = @transform_1, window_bounds = array<i64: 16, 64>}, {pipeline_mode = #tpu.pipeline_mode<synchronous>, transform_indices = @transform_2, window_bounds = array<i64: 1, 64>}, {pipeline_mode = #tpu.pipeline_mode<synchronous>, transform_indices = @transform_3, window_bounds = array<i64: 64, 128>}, {pipeline_mode = #tpu.pipeline_mode<synchronous>, transform_indices = @transform_4, window_bounds = array<i64: 1, 128>}, {pipeline_mode = #tpu.pipeline_mode<synchronous>, transform_indices = @transform_5, window_bounds = array<i64: 128, 32>}, {pipeline_mode = #tpu.pipeline_mode<synchronous>, transform_indices = @transform_6, window_bounds = array<i64: 1, 32>}, {transform_indices = @transform_7, window_bounds = array<i64: 8, 32>}]} {
    %c0 = arith.constant 0 : index
    %c0_0 = arith.constant 0 : index
    %0 = vector.load %arg2[%c0, %c0_0] : memref<16x64xf32, #tpu.memory_space<vmem>>, vector<16x64xf32>
    %c0_1 = arith.constant 0 : index
    %c0_2 = arith.constant 0 : index
    %1 = vector.load %arg4[%c0_1, %c0_2] : memref<64x128xf32, #tpu.memory_space<vmem>>, vector<64x128xf32>
    %c0_3 = arith.constant 0 : index
    %c0_4 = arith.constant 0 : index
    %2 = vector.load %arg6[%c0_3, %c0_4] : memref<128x32xf32, #tpu.memory_space<vmem>>, vector<128x32xf32>
    %c0_5 = arith.constant 0 : index
    %c0_6 = arith.constant 0 : index
    %3 = vector.load %arg3[%c0_5, %c0_6] : memref<1x64xf32, #tpu.memory_space<vmem>>, vector<1x64xf32>
    %c0_7 = arith.constant 0 : index
    %c0_8 = arith.constant 0 : index
    %4 = vector.load %arg5[%c0_7, %c0_8] : memref<1x128xf32, #tpu.memory_space<vmem>>, vector<1x128xf32>
    %c0_9 = arith.constant 0 : index
    %c0_10 = arith.constant 0 : index
    %5 = vector.load %arg7[%c0_9, %c0_10] : memref<1x32xf32, #tpu.memory_space<vmem>>, vector<1x32xf32>
    %c0_i32 = arith.constant 0 : i32
    %c8_i32 = arith.constant 8 : i32
    %6 = arith.muli %c0_i32, %c8_i32 : i32
    %7 = tpu.assume_multiple %6, 8 : i32
    %8 = arith.index_cast %7 : i32 to index
    %c0_11 = arith.constant 0 : index
    %9 = vector.load %arg1[%8, %c0_11] : memref<8x16xf32, #tpu.memory_space<vmem>>, vector<8x16xf32>
    %cst = arith.constant dense<0.000000e+00> : vector<8x64xf32>
    %10 = tpu.matmul %9, %0, %cst {dimension_numbers = #tpu.dot_dimension_numbers<[1], [0], [0], [1], [0, 0, 1, 1], [], []>} : vector<8x16xf32>, vector<16x64xf32>, vector<8x64xf32> -> vector<8x64xf32>
    %11 = vector.broadcast %3 : vector<1x64xf32> to vector<8x64xf32>
    %12 = arith.addf %10, %11 : vector<8x64xf32>
    %cst_12 = arith.constant 0.000000e+00 : f32
    %13 = vector.broadcast %cst_12 : f32 to vector<8x64xf32>
    %14 = arith.maximumf %12, %13 : vector<8x64xf32>
    %cst_13 = arith.constant dense<0.000000e+00> : vector<8x128xf32>
    %15 = tpu.matmul %14, %1, %cst_13 {dimension_numbers = #tpu.dot_dimension_numbers<[1], [0], [0], [1], [0, 0, 1, 1], [], []>} : vector<8x64xf32>, vector<64x128xf32>, vector<8x128xf32> -> vector<8x128xf32>
    %16 = vector.broadcast %4 : vector<1x128xf32> to vector<8x128xf32>
    %17 = arith.addf %15, %16 : vector<8x128xf32>
    %cst_14 = arith.constant 0.000000e+00 : f32
    %18 = vector.broadcast %cst_14 : f32 to vector<8x128xf32>
    %19 = arith.maximumf %17, %18 : vector<8x128xf32>
    %cst_15 = arith.constant dense<0.000000e+00> : vector<8x32xf32>
    %20 = tpu.matmul %19, %2, %cst_15 {dimension_numbers = #tpu.dot_dimension_numbers<[1], [0], [0], [1], [0, 0, 1, 1], [], []>} : vector<8x128xf32>, vector<128x32xf32>, vector<8x32xf32> -> vector<8x32xf32>
    %21 = vector.broadcast %5 : vector<1x32xf32> to vector<8x32xf32>
    %22 = arith.addf %20, %21 : vector<8x32xf32>
    %23 = arith.index_cast %7 : i32 to index
    %c0_16 = arith.constant 0 : index
    %24 = vector.load %arg8[%23, %c0_16] : memref<8x32xf32, #tpu.memory_space<vmem>>, vector<8x32xf32>
    tpu.vector_store %arg8[%23, %c0_16], %22 {strides = array<i32>} : memref<8x32xf32, #tpu.memory_space<vmem>>, vector<8x32xf32>,
    %c1_i32 = arith.constant 1 : i32
    return
  }
  func.func @transform_0(%arg0: i32) -> (i32, i32) {
    %c0_i32 = arith.constant 0 : i32
    %c0_i32_0 = arith.constant 0 : i32
    return %arg0, %c0_i32 : i32, i32
  }
  func.func @transform_1(%arg0: i32) -> (i32, i32) {
    %c0_i32 = arith.constant 0 : i32
    %c0_i32_0 = arith.constant 0 : i32
    %c0_i32_1 = arith.constant 0 : i32
    return %c0_i32, %c0_i32_0 : i32, i32
  }
  func.func @transform_2(%arg0: i32) -> (i32, i32) {
    %c0_i32 = arith.constant 0 : i32
    %c0_i32_0 = arith.constant 0 : i32
    %c0_i32_1 = arith.constant 0 : i32
    return %c0_i32, %c0_i32_0 : i32, i32
  }
  func.func @transform_3(%arg0: i32) -> (i32, i32) {
    %c0_i32 = arith.constant 0 : i32
    %c0_i32_0 = arith.constant 0 : i32
    %c0_i32_1 = arith.constant 0 : i32
    return %c0_i32, %c0_i32_0 : i32, i32
  }
  func.func @transform_4(%arg0: i32) -> (i32, i32) {
    %c0_i32 = arith.constant 0 : i32
    %c0_i32_0 = arith.constant 0 : i32
    %c0_i32_1 = arith.constant 0 : i32
    return %c0_i32, %c0_i32_0 : i32, i32
  }
  func.func @transform_5(%arg0: i32) -> (i32, i32) {
    %c0_i32 = arith.constant 0 : i32
    %c0_i32_0 = arith.constant 0 : i32
    %c0_i32_1 = arith.constant 0 : i32
    return %c0_i32, %c0_i32_0 : i32, i32
  }
  func.func @transform_6(%arg0: i32) -> (i32, i32) {
    %c0_i32 = arith.constant 0 : i32
    %c0_i32_0 = arith.constant 0 : i32
    %c0_i32_1 = arith.constant 0 : i32
    return %c0_i32, %c0_i32_0 : i32, i32
  }
  func.func @transform_7(%arg0: i32) -> (i32, i32) {
    %c0_i32 = arith.constant 0 : i32
    %c0_i32_0 = arith.constant 0 : i32
    return %arg0, %c0_i32 : i32, i32
  }
}

</mosaic_0001>

<llo_original>
// kernel: decoder_forward.1
$region0: #{decoder_forward.1}
  #allocation0 [shape = 'u32[]', space=smem, size = 0x4, offset = 0x4, fixed_abs, tag = 'smem constant byte address 0x4 - core index']
  #allocation1 [shape = 'u32[144,128]{1,0:T(1,128)}', space=vmem, size = 0x12000, scoped, tag = 'internal scratch']
  %s0 = inlined_call_operand.vmem [shape: f32[8,16], index: 0, kind: input, shape index: {}]
  %s1 = inlined_call_operand.vmem [shape: f32[16,64], index: 1, kind: input, shape index: {}]
  %s2 = inlined_call_operand.vmem [shape: f32[1,64], index: 2, kind: input, shape index: {}]
  %s3 = inlined_call_operand.vmem [shape: f32[64,128], index: 3, kind: input, shape index: {}]
  %s4 = inlined_call_operand.vmem [shape: f32[1,128], index: 4, kind: input, shape index: {}]
  %s5 = inlined_call_operand.vmem [shape: f32[128,32], index: 5, kind: input, shape index: {}]
  %s6 = inlined_call_operand.vmem [shape: f32[1,32], index: 6, kind: input, shape index: {}]
  %s7 = inlined_call_operand.hbm [shape: f32[8,32], index: 7, kind: output, shape index: {}]
  %s8 = sld [smem:[#allocation0]]
  $region38: #{decoder_forward.1} parent=0
    _
  %s10 = ssub.s32 1, %s8
  %s11 = scalar_select 0, %s10, %s8
  $region1: #{decoder_forward.1} parent=0
    #allocation2 [shape = 'u8[4096]{0}', space=vmem, size = 0x1000, scoped, tag = 'output window, operand 0, single buffered']
    #allocation3 [shape = 's32[1]{0}', space=sflag, size = 0x4, scoped, tag = 'scoped memory for decoder_forward.1']
    %12 = vsyncpa [#allocation3], 0
    // Predicated region
    $region2: #{decoder_forward.1} parent=1 // pred_check
      _
    $region3: #{decoder_forward.1} parent=1 // pred_check_branch
      %14 = sbr.rel (0) target = $region5
    $region4: #{decoder_forward.1} parent=1 // pred_region
      _
    $region5: #{decoder_forward.1} parent=1 // pred_fallthru
      _
    // Predicated region
    $region6: #{decoder_forward.1} parent=1 // pred_check
      _
    $region7: #{decoder_forward.1} parent=1 // pred_check_branch
      %16 = sbr.rel (0) target = $region9
    $region8: #{decoder_forward.1} parent=1 // pred_region
      _
    $region9: #{decoder_forward.1} parent=1 // pred_fallthru
      _
    // Predicated region
    $region10: #{decoder_forward.1} parent=1 // pred_check
      _
    $region11: #{decoder_forward.1} parent=1 // pred_check_branch
      %18 = sbr.rel (0) target = $region13
    $region12: #{decoder_forward.1} parent=1 // pred_region
      _
    $region13: #{decoder_forward.1} parent=1 // pred_fallthru
      _
    // Predicated region
    $region14: #{decoder_forward.1} parent=1 // pred_check
      _
    $region15: #{decoder_forward.1} parent=1 // pred_check_branch
      %20 = sbr.rel (0) target = $region17
    $region16: #{decoder_forward.1} parent=1 // pred_region
      _
    $region17: #{decoder_forward.1} parent=1 // pred_fallthru
      _
    // Predicated region
    $region18: #{decoder_forward.1} parent=1 // pred_check
      _
    $region19: #{decoder_forward.1} parent=1 // pred_check_branch
      %22 = sbr.rel (0) target = $region21
    $region20: #{decoder_forward.1} parent=1 // pred_region
      _
    $region21: #{decoder_forward.1} parent=1 // pred_fallthru
      _
    // Predicated region
    $region22: #{decoder_forward.1} parent=1 // pred_check
      _
    $region23: #{decoder_forward.1} parent=1 // pred_check_branch
      %24 = sbr.rel (0) target = $region25
    $region24: #{decoder_forward.1} parent=1 // pred_region
      _
    $region25: #{decoder_forward.1} parent=1 // pred_fallthru
      _
    // Predicated region
    $region26: #{decoder_forward.1} parent=1 // pred_check
      _
    $region27: #{decoder_forward.1} parent=1 // pred_check_branch
      %26 = sbr.rel (0) target = $region29
    $region28: #{decoder_forward.1} parent=1 // pred_region
      _
    $region29: #{decoder_forward.1} parent=1 // pred_fallthru
      _
    %v27 = vld [vmem:[%s1] sm:$0xff]
    %v28 = vld [vmem:[%s1 + $0x8] sm:$0xff]
    %v29 = vld [vmem:[%s3] sm:$0xff]
    %v30 = vld [vmem:[%s3 + $0x8] sm:$0xff]
    %v31 = vld [vmem:[%s3 + $0x10] sm:$0xff]
    %v32 = vld [vmem:[%s3 + $0x18] sm:$0xff]
    %v33 = vld [vmem:[%s3 + $0x20] sm:$0xff]
    %v34 = vld [vmem:[%s3 + $0x28] sm:$0xff]
    %v35 = vld [vmem:[%s3 + $0x30] sm:$0xff]
    %v36 = vld [vmem:[%s3 + $0x38] sm:$0xff]
    %v37 = vld [vmem:[%s5] sm:$0xff]
    %v38 = vld [vmem:[%s5 + $0x8] sm:$0xff]
    %v39 = vld [vmem:[%s5 + $0x10] sm:$0xff]
    %v40 = vld [vmem:[%s5 + $0x18] sm:$0xff]
    %v41 = vld [vmem:[%s5 + $0x20] sm:$0xff]
    %v42 = vld [vmem:[%s5 + $0x28] sm:$0xff]
    %v43 = vld [vmem:[%s5 + $0x30] sm:$0xff]
    %v44 = vld [vmem:[%s5 + $0x38] sm:$0xff]
    %v45 = vld [vmem:[%s5 + $0x40] sm:$0xff]
    %v46 = vld [vmem:[%s5 + $0x48] sm:$0xff]
    %v47 = vld [vmem:[%s5 + $0x50] sm:$0xff]
    %v48 = vld [vmem:[%s5 + $0x58] sm:$0xff]
    %v49 = vld [vmem:[%s5 + $0x60] sm:$0xff]
    %v50 = vld [vmem:[%s5 + $0x68] sm:$0xff]
    %v51 = vld [vmem:[%s5 + $0x70] sm:$0xff]
    %v52 = vld [vmem:[%s5 + $0x78] sm:$0xff]
    %v53 = vld [vmem:[%s2] sm:$0x1]
    %v54 = vld [vmem:[%s4] sm:$0x1]
    %v55 = vld [vmem:[%s6] sm:$0x1]
    %v56 = vld [vmem:[%s0] sm:$0xff]
    %v58 = vlaneseq
    %v59 = vshrl.u32 %v58, 7
    %v60 = vsub.s32 0, %v59
    %v61 = vrot.slane %v53, %v60
    %vm63 = vcmask 130048
    %v65 = vsel %vm63, %v56, 0
    %67 = vmatprep.subr.mxu0 0.0
    %68 = vmatpush1.msra.mxu0 0.0
    %69 = vmatprep.subr.mxu0 0.0
    %70 = vmatpush1.msra.mxu0 0.0
    %71 = vmatprep.subr.mxu0 0.0
    %72 = vmatpush1.msra.mxu0 0.0
    %73 = vmatprep.subr.mxu0 0.0
    %74 = vmatpush1.msra.mxu0 0.0
    %75 = vmatprep.subr.mxu0 0.0
    %76 = vmatpush1.msra.mxu0 0.0
    %77 = vmatprep.subr.mxu0 0.0
    %78 = vmatpush1.msra.mxu0 0.0
    %79 = vmatprep.subr.mxu0 0.0
    %80 = vmatpush1.msra.mxu0 0.0
    %81 = vmatprep.subr.mxu0 0.0
    %82 = vmatpush1.msra.mxu0 0.0
    %83 = vmatprep.subr.mxu0 0.0
    %84 = vmatpush1.msra.mxu0 0.0
    %85 = vmatprep.subr.mxu0 0.0
    %86 = vmatpush1.msra.mxu0 0.0
    %87 = vmatprep.subr.mxu0 0.0
    %88 = vmatpush1.msra.mxu0 0.0
    %89 = vmatprep.subr.mxu0 0.0
    %90 = vmatpush1.msra.mxu0 0.0
    %91 = vmatprep.subr.mxu0 0.0
    %92 = vmatpush1.msra.mxu0 0.0
    %93 = vmatprep.subr.mxu0 0.0
    %94 = vmatpush1.msra.mxu0 0.0
    %95 = vmatprep.subr.mxu0 0.0
    %96 = vmatpush1.msra.mxu0 %v28
    %97 = vmatprep.subr.mxu0 0.0
    %98 = vmatpush1.msra.mxu0 %v27
    %99 = vmatprep.subr.mxu0 0.0
    %100 = vmatpush2.msra.mxu0 0.0
    %101 = vmatprep.subr.mxu0 0.0
    %102 = vmatpush2.msra.mxu0 0.0
    %103 = vmatprep.subr.mxu0 0.0
    %104 = vmatpush2.msra.mxu0 0.0
    %105 = vmatprep.subr.mxu0 0.0
    %106 = vmatpush2.msra.mxu0 0.0
    %107 = vmatprep.subr.mxu0 0.0
    %108 = vmatpush2.msra.mxu0 0.0
    %109 = vmatprep.subr.mxu0 0.0
    %110 = vmatpush2.msra.mxu0 0.0
    %111 = vmatprep.subr.mxu0 0.0
    %112 = vmatpush2.msra.mxu0 0.0
    %113 = vmatprep.subr.mxu0 0.0
    %114 = vmatpush2.msra.mxu0 0.0
    %115 = vmatprep.subr.mxu0 0.0
    %116 = vmatpush2.msra.mxu0 0.0
    %117 = vmatprep.subr.mxu0 0.0
    %118 = vmatpush2.msra.mxu0 0.0
    %119 = vmatprep.subr.mxu0 0.0
    %120 = vmatpush2.msra.mxu0 0.0
    %121 = vmatprep.subr.mxu0 0.0
    %122 = vmatpush2.msra.mxu0 0.0
    %123 = vmatprep.subr.mxu0 0.0
    %124 = vmatpush2.msra.mxu0 0.0
    %125 = vmatprep.subr.mxu0 0.0
    %126 = vmatpush2.msra.mxu0 0.0
    %127 = vmatprep.subr.mxu0 0.0
    %128 = vmatpush2.msra.mxu0 0.0
    %129 = vmatprep.subr.mxu0 0.0
    %130 = vmatpush2.msra.mxu0 0.0
    %131 = vmatprep.mubr.f32.mxu0 0.0
    %132 = vmatmul.mubr.f32.gmra.mxu0 %v65
    %v133 = vpop.f32.mrf.mxu0
    %v134 = vadd.f32 %v61, %v133
    %v135 = vpop.f32.mrf.mxu0
    %136 = vdwg.mxu0
    %v137 = vmax.f32 %v134, 0.0
    %v139 = vlaneseq
    %v140 = vshrl.u32 %v139, 7
    %v141 = vsub.s32 0, %v140
    %v142 = vrot.slane %v54, %v141
    %vm144 = vcmask 523264
    %v146 = vsel %vm144, %v137, 0
    %148 = vmatprep.subr.mxu0 0.0
    %149 = vmatpush1.msra.mxu0 0.0
    %150 = vmatprep.subr.mxu0 0.0
    %151 = vmatpush1.msra.mxu0 0.0
    %152 = vmatprep.subr.mxu0 0.0
    %153 = vmatpush1.msra.mxu0 0.0
    %154 = vmatprep.subr.mxu0 0.0
    %155 = vmatpush1.msra.mxu0 0.0
    %156 = vmatprep.subr.mxu0 0.0
    %157 = vmatpush1.msra.mxu0 0.0
    %158 = vmatprep.subr.mxu0 0.0
    %159 = vmatpush1.msra.mxu0 0.0
    %160 = vmatprep.subr.mxu0 0.0
    %161 = vmatpush1.msra.mxu0 0.0
    %162 = vmatprep.subr.mxu0 0.0
    %163 = vmatpush1.msra.mxu0 0.0
    %164 = vmatprep.subr.mxu0 0.0
    %165 = vmatpush1.msra.mxu0 %v36
    %166 = vmatprep.subr.mxu0 0.0
    %167 = vmatpush1.msra.mxu0 %v35
    %168 = vmatprep.subr.mxu0 0.0
    %169 = vmatpush1.msra.mxu0 %v34
    %170 = vmatprep.subr.mxu0 0.0
    %171 = vmatpush1.msra.mxu0 %v33
    %172 = vmatprep.subr.mxu0 0.0
    %173 = vmatpush1.msra.mxu0 %v32
    %174 = vmatprep.subr.mxu0 0.0
    %175 = vmatpush1.msra.mxu0 %v31
    %176 = vmatprep.subr.mxu0 0.0
    %177 = vmatpush1.msra.mxu0 %v30
    %178 = vmatprep.subr.mxu0 0.0
    %179 = vmatpush1.msra.mxu0 %v29
    %180 = vmatprep.subr.mxu0 0.0
    %181 = vmatpush2.msra.mxu0 0.0
    %182 = vmatprep.subr.mxu0 0.0
    %183 = vmatpush2.msra.mxu0 0.0
    %184 = vmatprep.subr.mxu0 0.0
    %185 = vmatpush2.msra.mxu0 0.0
    %186 = vmatprep.subr.mxu0 0.0
    %187 = vmatpush2.msra.mxu0 0.0
    %188 = vmatprep.subr.mxu0 0.0
    %189 = vmatpush2.msra.mxu0 0.0
    %190 = vmatprep.subr.mxu0 0.0
    %191 = vmatpush2.msra.mxu0 0.0
    %192 = vmatprep.subr.mxu0 0.0
    %193 = vmatpush2.msra.mxu0 0.0
    %194 = vmatprep.subr.mxu0 0.0
    %195 = vmatpush2.msra.mxu0 0.0
    %196 = vmatprep.subr.mxu0 0.0
    %197 = vmatpush2.msra.mxu0 0.0
    %198 = vmatprep.subr.mxu0 0.0
    %199 = vmatpush2.msra.mxu0 0.0
    %200 = vmatprep.subr.mxu0 0.0
    %201 = vmatpush2.msra.mxu0 0.0
    %202 = vmatprep.subr.mxu0 0.0
    %203 = vmatpush2.msra.mxu0 0.0
    %204 = vmatprep.subr.mxu0 0.0
    %205 = vmatpush2.msra.mxu0 0.0
    %206 = vmatprep.subr.mxu0 0.0
    %207 = vmatpush2.msra.mxu0 0.0
    %208 = vmatprep.subr.mxu0 0.0
    %209 = vmatpush2.msra.mxu0 0.0
    %210 = vmatprep.subr.mxu0 0.0
    %211 = vmatpush2.msra.mxu0 0.0
    %212 = vmatprep.mubr.f32.mxu0 0.0
    %213 = vmatmul.mubr.f32.gmra.mxu0 %v146
    %v214 = vpop.f32.mrf.mxu0
    %v215 = vadd.f32 %v142, %v214
    %v216 = vpop.f32.mrf.mxu0
    %217 = vdwg.mxu0
    %v218 = vmax.f32 %v215, 0.0
    %v220 = vlaneseq
    %v221 = vshrl.u32 %v220, 7
    %v222 = vsub.s32 0, %v221
    %v223 = vrot.slane %v55, %v222
    %225 = vmatprep.subr.mxu0 0.0
    %226 = vmatpush1.msra.mxu0 %v52
    %227 = vmatprep.subr.mxu0 0.0
    %228 = vmatpush1.msra.mxu0 %v51
    %229 = vmatprep.subr.mxu0 0.0
    %230 = vmatpush1.msra.mxu0 %v50
    %231 = vmatprep.subr.mxu0 0.0
    %232 = vmatpush1.msra.mxu0 %v49
    %233 = vmatprep.subr.mxu0 0.0
    %234 = vmatpush1.msra.mxu0 %v48
    %235 = vmatprep.subr.mxu0 0.0
    %236 = vmatpush1.msra.mxu0 %v47
    %237 = vmatprep.subr.mxu0 0.0
    %238 = vmatpush1.msra.mxu0 %v46
    %239 = vmatprep.subr.mxu0 0.0
    %240 = vmatpush1.msra.mxu0 %v45
    %241 = vmatprep.subr.mxu0 0.0
    %242 = vmatpush1.msra.mxu0 %v44
    %243 = vmatprep.subr.mxu0 0.0
    %244 = vmatpush1.msra.mxu0 %v43
    %245 = vmatprep.subr.mxu0 0.0
    %246 = vmatpush1.msra.mxu0 %v42
    %247 = vmatprep.subr.mxu0 0.0
    %248 = vmatpush1.msra.mxu0 %v41
    %249 = vmatprep.subr.mxu0 0.0
    %250 = vmatpush1.msra.mxu0 %v40
    %251 = vmatprep.subr.mxu0 0.0
    %252 = vmatpush1.msra.mxu0 %v39
    %253 = vmatprep.subr.mxu0 0.0
    %254 = vmatpush1.msra.mxu0 %v38
    %255 = vmatprep.subr.mxu0 0.0
    %256 = vmatpush1.msra.mxu0 %v37
    %257 = vmatprep.subr.mxu0 0.0
    %258 = vmatpush2.msra.mxu0 0.0
    %259 = vmatprep.subr.mxu0 0.0
    %260 = vmatpush2.msra.mxu0 0.0
    %261 = vmatprep.subr.mxu0 0.0
    %262 = vmatpush2.msra.mxu0 0.0
    %263 = vmatprep.subr.mxu0 0.0
    %264 = vmatpush2.msra.mxu0 0.0
    %265 = vmatprep.subr.mxu0 0.0
    %266 = vmatpush2.msra.mxu0 0.0
    %267 = vmatprep.subr.mxu0 0.0
    %268 = vmatpush2.msra.mxu0 0.0
    %269 = vmatprep.subr.mxu0 0.0
    %270 = vmatpush2.msra.mxu0 0.0
    %271 = vmatprep.subr.mxu0 0.0
    %272 = vmatpush2.msra.mxu0 0.0
    %273 = vmatprep.subr.mxu0 0.0
    %274 = vmatpush2.msra.mxu0 0.0
    %275 = vmatprep.subr.mxu0 0.0
    %276 = vmatpush2.msra.mxu0 0.0
    %277 = vmatprep.subr.mxu0 0.0
    %278 = vmatpush2.msra.mxu0 0.0
    %279 = vmatprep.subr.mxu0 0.0
    %280 = vmatpush2.msra.mxu0 0.0
    %281 = vmatprep.subr.mxu0 0.0
    %282 = vmatpush2.msra.mxu0 0.0
    %283 = vmatprep.subr.mxu0 0.0
    %284 = vmatpush2.msra.mxu0 0.0
    %285 = vmatprep.subr.mxu0 0.0
    %286 = vmatpush2.msra.mxu0 0.0
    %287 = vmatprep.subr.mxu0 0.0
    %288 = vmatpush2.msra.mxu0 0.0
    %289 = vmatprep.mubr.f32.mxu0 0.0
    %290 = vmatmul.mubr.f32.gmra.mxu0 %v218
    %v291 = vpop.f32.mrf.mxu0
    %v292 = vadd.f32 %v223, %v291
    %v293 = vpop.f32.mrf.mxu0
    %294 = vdwg.mxu0
    %vm295 = vcmask 261120
    %296 = vst.msk [vmem:[#allocation2] sm:$0xff] %vm295, %v292
    // Predicated region
    $region30: #{decoder_forward.1} parent=1 // pred_check
      _
    $region31: #{decoder_forward.1} parent=1 // pred_check_branch
      %298 = sbr.rel (0) target = $region33
    $region32: #{decoder_forward.1} parent=1 // pred_region
      %s300 = ssub.s32 128, 128
      %301 = vsyncadd [#allocation3], %s300
      %s303 = sshll.u32 [#allocation2], 4
      %s304 = int_to_ptr.vmem [resolvable:$true] %s303
      %306 = dma.vmem_to_hbm [thread:$0]  %s304, 128, %s7, [#allocation3]
    $region33: #{decoder_forward.1} parent=1 // pred_fallthru
      _
    // Predicated region
    $region34: #{decoder_forward.1} parent=1 // pred_check
      _
    $region35: #{decoder_forward.1} parent=1 // pred_check_branch
      %308 = sbr.rel (0) target = $region37
    $region36: #{decoder_forward.1} parent=1 // pred_region
      %309 = dma.done [#allocation3], 128
    $region37: #{decoder_forward.1} parent=1 // pred_fallthru
      _
    %310 = vsyncpa [#allocation3], 1

</llo_original>
